<compile_context>
chip_gen: v6e
topology: v6e:2x2x1
jax: 0.10.0
libtpu: 0.0.40
codegen_flags: <defaults>
</compile_context>

<pallas_src>
import jax
import jax.numpy as jnp
from jax.experimental import pallas as pl
from jax.experimental.pallas import tpu as pltpu

_LANES = 128
_MIB = 1024 * 1024


def _sin_kernel(x_ref, o_ref):
    # Elementwise sin on the whole VMEM tile (VPU/EUP path).
    o_ref[...] = jnp.sin(x_ref[...])


def _sublane_multiple(dtype) -> int:
    # Min sublane alignment per dtype: 8 (4B), 16 (2B), 32 (1B).
    itemsize = jnp.dtype(dtype).itemsize
    return max(8, 32 // itemsize)


def _tpu_budget():
    """(target_tile_bytes, vmem_limit_bytes) picked from the TPU generation."""
    vmem_cap = 64 * _MIB  # conservative default (v7x per-core VMEM)
    try:
        info = pltpu.get_tpu_info()
        vmem_cap = int(getattr(info, "vmem_capacity_bytes", vmem_cap)) or vmem_cap
    except Exception:
        pass
    if vmem_cap >= 128 * _MIB:        # v5e / v6e: 128 MiB physical VMEM
        return 4 * _MIB, 64 * _MIB
    return 2 * _MIB, 40 * _MIB        # v7x (64 MiB physical) or unknown


def _pick_tile_rows(rows: int, sub: int, tr_target: int) -> int:
    """Tile rows: large (sublane-aligned) tiles, but always >=2 grid steps
    for anything bigger than a single sublane group, so the 'parallel' grid
    axis can shard across both TensorCores on v7x."""
    if rows <= sub:
        return rows                       # tiny: one full-dim block
    if rows > tr_target:
        return tr_target                  # large: cdiv(rows, tr_target) >= 2 steps
    half = pl.cdiv(rows, 2)               # mid-sized: force a 2-step grid
    return min(rows, pl.cdiv(half, sub) * sub)


def _run_sin_2d(x2d: jax.Array, *, sub: int, tile_bytes: int,
                vmem_limit_bytes: int, donate: bool = False) -> jax.Array:
    rows, lanes = x2d.shape
    itemsize = jnp.dtype(x2d.dtype).itemsize
    tr_target = max(sub, (tile_bytes // max(1, lanes * itemsize)) // sub * sub)
    tr = _pick_tile_rows(rows, sub, tr_target)
    grid = (pl.cdiv(rows, tr),)
    extra = {"input_output_aliases": {0: 0}} if donate else {}
    return pl.pallas_call(
        _sin_kernel,
        out_shape=jax.ShapeDtypeStruct((rows, lanes), x2d.dtype),
        grid=grid,
        in_specs=[pl.BlockSpec((tr, lanes), lambda i: (i, 0))],
        out_specs=pl.BlockSpec((tr, lanes), lambda i: (i, 0)),
        compiler_params=pltpu.CompilerParams(
            dimension_semantics=("parallel",),
            vmem_limit_bytes=vmem_limit_bytes,
        ),
        **extra,
    )(x2d)


def sin_act(x: jax.Array, *, donate: bool = False) -> jax.Array:
    """Applies sin(x) elementwise via a Pallas TPU kernel.

    donate=True adds input_output_aliases={0: 0}; only use it when the caller
    will not read x again.
    """
    orig_shape = x.shape
    n = x.size
    if n == 0:
        return x

    dtype = x.dtype
    itemsize = jnp.dtype(dtype).itemsize
    sub = _sublane_multiple(dtype)
    tile_bytes, vmem_limit = _tpu_budget()

    # Path A: last dim already lane-aligned -> keep it as the lane axis and
    # collapse only leading dims (bitcast when the 2nd-to-last dim is
    # sublane-aligned; avoids a (rows,128) relayout copy).
    if (x.ndim >= 2 and orig_shape[-1] % _LANES == 0
            and orig_shape[-1] * itemsize <= tile_bytes):
        lanes = orig_shape[-1]
        out = _run_sin_2d(x.reshape(-1, lanes), sub=sub, tile_bytes=tile_bytes,
                          vmem_limit_bytes=vmem_limit, donate=donate)
        return out.reshape(orig_shape)

    # Path B: total size lane-aligned -> lane-dense (rows, 128) slab.
    # NOTE: for shapes whose trailing dims are not (8,128)-tile aligned XLA may
    # insert a relayout around the pallas_call; lane-dense stores still win for
    # large arrays and small arrays don't care.
    if n % _LANES == 0:
        out = _run_sin_2d(x.reshape(-1, _LANES), sub=sub, tile_bytes=tile_bytes,
                          vmem_limit_bytes=vmem_limit, donate=donate)
        return out.reshape(orig_shape)

    # Path C: unaligned size -> kernel on the 128-aligned prefix, plain jnp.sin
    # on the <128-element tail.  No zero-pad / slice-back HBM round trips.
    flat = x.reshape(-1)
    n_main = (n // _LANES) * _LANES
    if n_main == 0:
        return jnp.sin(x)  # fewer than 128 elements: not worth a kernel launch
    head = _run_sin_2d(flat[:n_main].reshape(-1, _LANES), sub=sub,
                       tile_bytes=tile_bytes, vmem_limit_bytes=vmem_limit)
    tail = jnp.sin(flat[n_main:])
    return jnp.concatenate([head.reshape(-1), tail]).reshape(orig_shape)


if __name__ == "__main__":
    key = jax.random.PRNGKey(0)
    k1, k2, k3, k4, k5 = jax.random.split(key, 5)

    # 1) Small NCHW-style input (PINN activation usage) -> Path B, 2-step grid.
    x = jax.random.normal(k1, (2, 4, 16, 16), dtype=jnp.float32)
    y = sin_act(x)
    jax.block_until_ready(y)
    assert y.shape == x.shape and y.dtype == x.dtype
    assert jnp.allclose(y, jnp.sin(x), atol=1e-6, rtol=1e-6)

    # 2) Lane-aligned last dim -> Path A (no reshape-to-128 relayout), 2 steps.
    x_la = jax.random.normal(k2, (4, 8, 128), dtype=jnp.float32)
    y_la = sin_act(x_la)
    jax.block_until_ready(y_la)
    assert y_la.shape == x_la.shape
    assert jnp.allclose(y_la, jnp.sin(x_la), atol=1e-6, rtol=1e-6)

    # 3) Unaligned size -> Path C: kernel on the 128-aligned prefix + jnp tail.
    x2 = jax.random.normal(k3, (3, 5, 17), dtype=jnp.float32)
    y2 = sin_act(x2)
    jax.block_until_ready(y2)
    assert y2.shape == x2.shape and y2.dtype == x2.dtype
    assert jnp.allclose(y2, jnp.sin(x2), atol=1e-6, rtol=1e-6)

    # 4) Tiny (<128 elements) -> pure tail fallback.
    x3 = jax.random.normal(k4, (3, 5, 7), dtype=jnp.float32)
    y3 = sin_act(x3)
    jax.block_until_ready(y3)
    assert y3.shape == x3.shape
    assert jnp.allclose(y3, jnp.sin(x3), atol=1e-6, rtol=1e-6)

    # 5) bf16 input -> dtype-aware sublane alignment.
    x4 = jax.random.normal(k5, (2, 4, 16, 16), dtype=jnp.bfloat16)
    y4 = sin_act(x4)
    jax.block_until_ready(y4)
    assert y4.shape == x4.shape and y4.dtype == jnp.bfloat16
    assert jnp.allclose(
        y4.astype(jnp.float32), jnp.sin(x4).astype(jnp.float32),
        atol=2e-2, rtol=2e-2,
    )

    print("KERNEL_OK")
</pallas_src>

<mosaic_0001>
module attributes {stable_mosaic.version = 11 : i64} {
  func.func @_sin_kernel(%arg0: i32, %arg1: memref<8x128xf32, #tpu.memory_space<vmem>>, %arg2: memref<8x128xf32, #tpu.memory_space<vmem>>) attributes {dimension_semantics = [#tpu.dimension_semantics<parallel>], iteration_bounds = array<i64: 2>, scalar_prefetch = 0 : i64, scratch_operands = 0 : i64, tpu.core_type = #tpu.core_type<tc>, window_params = [{transform_indices = @transform_0, window_bounds = array<i64: 8, 128>}, {transform_indices = @transform_1, window_bounds = array<i64: 8, 128>}]} {
    %c0 = arith.constant 0 : index
    %c0_0 = arith.constant 0 : index
    %0 = vector.load %arg1[%c0, %c0_0] : memref<8x128xf32, #tpu.memory_space<vmem>>, vector<8x128xf32>
    %1 = math.sin %0 : vector<8x128xf32>
    %c0_1 = arith.constant 0 : index
    %c0_2 = arith.constant 0 : index
    %2 = vector.load %arg2[%c0_1, %c0_2] : memref<8x128xf32, #tpu.memory_space<vmem>>, vector<8x128xf32>
    tpu.vector_store %arg2[%c0_1, %c0_2], %1 {strides = array<i32>} : memref<8x128xf32, #tpu.memory_space<vmem>>, vector<8x128xf32>,
    return
  }
  func.func @transform_0(%arg0: i32) -> (i32, i32) {
    %c0_i32 = arith.constant 0 : i32
    %c0_i32_0 = arith.constant 0 : i32
    return %arg0, %c0_i32 : i32, i32
  }
  func.func @transform_1(%arg0: i32) -> (i32, i32) {
    %c0_i32 = arith.constant 0 : i32
    %c0_i32_0 = arith.constant 0 : i32
    return %arg0, %c0_i32 : i32, i32
  }
}

</mosaic_0001>

<llo_original>
// kernel: tpu_custom_call.1
$region0: #{tpu_custom_call.1}
  #allocation0 [shape = 'u32[]', space=smem, size = 0x4, offset = 0x4, fixed_abs, tag = 'smem constant byte address 0x4 - core index']
  #allocation1 [shape = 'u32[144,128]{1,0:T(1,128)}', space=vmem, size = 0x12000, scoped, tag = 'internal scratch']
  %s0 = inlined_call_operand.hbm [shape: f32[16,128], index: 0, kind: input, shape index: {}]
  %s1 = inlined_call_operand.hbm [shape: f32[16,128], index: 1, kind: output, shape index: {}]
  %s2 = sld [smem:[#allocation0]]
  $region41: #{tpu_custom_call.1} parent=0
    _
  %s4 = ssub.s32 1, %s2
  %s5 = scalar_select 0, %s4, %s2
  $region1: #{tpu_custom_call.1} parent=0
    #allocation2 [shape = 'u8[8192]{0}', space=vmem, size = 0x2000, scoped, tag = 'input window, operand 0']
    #allocation3 [shape = 's32[2]{0}', space=sflag, size = 0x8, scoped, tag = 'scoped memory for tpu_custom_call.1']
    #allocation4 [shape = 's32[2]{0}', space=sflag, size = 0x8, scoped, tag = 'scoped memory for tpu_custom_call.1']
    #allocation5 [shape = 'u8[8192]{0}', space=vmem, size = 0x2000, scoped, tag = 'output window, operand 0']
    %6 = vsyncpa [#allocation3], 0
    %s7 = scalar_lea.sflag [#allocation3], 1
    %8 = vsyncpa %s7, 0
    %9 = vsyncpa [#allocation4], 0
    %s10 = scalar_lea.sflag [#allocation4], 1
    %11 = vsyncpa %s10, 0
    loop: start=0, step=1, limit=4
    $region2: #{tpu_custom_call.1} parent=1 // loop_pre_header
      _
    $region3: #{tpu_custom_call.1} parent=1 // loop_header
      %s13 = sphi 0, %s17
      %p14 = scmp.ge.s32.totalorder %s13, 4
      %s23 = sphi 0, %s25
      %s26 = sphi 0, %s23
      %s27 = sphi 0, %s26
      %s43 = sphi 0, %s27
      %s49 = sphi 0, %s51
      %s52 = sphi 0, %s49
      %s53 = sphi 0, %s52
      %s69 = sphi 0, %s53
    $region4: #{tpu_custom_call.1} parent=1 // loop_header_branch
      %16 = sbr.rel (%p14) target = $region8
    $region5: #{tpu_custom_call.1} parent=1 // loop_body
      %s18 = ssub.s32 %s13, 1
      %s19 = ssub.s32 %s13, 2
      %s20 = sadd.s32 %s13, 1
      %s21 = ssub.s32 %s13, %s20
      %p22 = scmp.eq.s32.totalorder %s21, 0
      %s24 = sadd.s32 %s23, 1
      %s25 = scalar_select %p22, %s23, %s24
      %p28 = pneg %p22
      %p29 = scmp.eq.s32.totalorder %s13, 1
      %p30 = por %p28, %p29
      %p31 = scmp.ne.s32.totalorder %s23, %s26
      %p32 = scmp.eq.s32.totalorder %s13, 0
      %p33 = por %p31, %p32
      %p34 = scmp.ne.s32.totalorder %s23, %s26
      %p35 = scmp.eq.s32.totalorder %s18, 1
      %p36 = por %p34, %p35
      %p37 = scmp.ne.s32.totalorder %s26, %s27
      %p38 = scmp.eq.s32.totalorder %s18, 0
      %p39 = por %p37, %p38
      %p40 = scmp.ne.s32.totalorder %s26, %s27
      %p41 = scmp.eq.s32.totalorder %s19, 1
      %p42 = por %p40, %p41
      %p44 = scmp.ne.s32.totalorder %s27, %s43
      %p45 = scmp.eq.s32.totalorder %s19, 0
      %p46 = por %p44, %p45
      %s47 = ssub.s32 %s13, %s20
      %p48 = scmp.eq.s32.totalorder %s47, 0
      %s50 = sadd.s32 %s49, 1
      %s51 = scalar_select %p48, %s49, %s50
      %p54 = pneg %p48
      %p55 = scmp.eq.s32.totalorder %s13, 1
      %p56 = por %p54, %p55
      %p57 = scmp.ne.s32.totalorder %s49, %s52
      %p58 = scmp.eq.s32.totalorder %s13, 0
      %p59 = por %p57, %p58
      %p60 = scmp.ne.s32.totalorder %s49, %s52
      %p61 = scmp.eq.s32.totalorder %s18, 1
      %p62 = por %p60, %p61
      %p63 = scmp.ne.s32.totalorder %s52, %s53
      %p64 = scmp.eq.s32.totalorder %s18, 0
      %p65 = por %p63, %p64
      %p66 = scmp.ne.s32.totalorder %s52, %s53
      %p67 = scmp.eq.s32.totalorder %s19, 1
      %p68 = por %p66, %p67
      %p70 = scmp.ne.s32.totalorder %s53, %s69
      %p71 = scmp.eq.s32.totalorder %s19, 0
      %p72 = por %p70, %p71
      %p73 = scmp.le.s32.totalorder 1, %s13
      %p74 = scmp.lt.s32.totalorder %s13, 3
      %p75 = pnand %p73, %p74
      %p76 = pneg %p75
      // Predicated region
      $region9: #{tpu_custom_call.1} parent=5 // pred_check
        _
      $region10: #{tpu_custom_call.1} parent=5 // pred_check_branch
        %78 = sbr.rel (%p75) target = $region12
      $region11: #{tpu_custom_call.1} parent=5 // pred_region
        %s79 = ssub.s32 %s13, 1
      $region12: #{tpu_custom_call.1} parent=5 // pred_fallthru
        _
      %p80 = scmp.lt.s32.totalorder %s13, 2
      // Predicated region
      $region13: #{tpu_custom_call.1} parent=5 // pred_check
        %p81 = pneg %p80
      $region14: #{tpu_custom_call.1} parent=5 // pred_check_branch
        %83 = sbr.rel (%p81) target = $region16
      $region15: #{tpu_custom_call.1} parent=5 // pred_region
        // Predicated region
        $region17: #{tpu_custom_call.1} parent=15 // pred_check
          %p84 = pneg %p33
        $region18: #{tpu_custom_call.1} parent=15 // pred_check_branch
          %86 = sbr.rel (%p84) target = $region20
        $region19: #{tpu_custom_call.1} parent=15 // pred_region
          %s87 = sand.u32 %s23, 1
          %s88 = scalar_lea.sflag [#allocation3], %s87
          %s89 = sand.u32 %s23, 1
          %s90 = smul.addr %s89, 8
          %s91 = scalar_lea.vmem [#allocation2], %s90
          %s93 = ssub.s32 128, 128
          %94 = vsyncadd %s88, %s93
          %s95 = smul.addr %s13, 128
          %s96 = scalar_lea.hbm %s0, %s95
          %s98 = sshll.u32 %s91, 4
          %s99 = int_to_ptr.vmem [resolvable:$true] %s98
          %101 = dma.hbm_to_vmem [thread:$0]  %s96, 128, %s99, %s88
        $region20: #{tpu_custom_call.1} parent=15 // pred_fallthru
          _
      $region16: #{tpu_custom_call.1} parent=5 // pred_fallthru
        _
      %p102 = scmp.le.s32.totalorder 1, %s13
      %p103 = scmp.lt.s32.totalorder %s13, 3
      %p104 = pnand %p102, %p103
      %p105 = pneg %p104
      // Predicated region
      $region21: #{tpu_custom_call.1} parent=5 // pred_check
        _
      $region22: #{tpu_custom_call.1} parent=5 // pred_check_branch
        %107 = sbr.rel (%p104) target = $region24
      $region23: #{tpu_custom_call.1} parent=5 // pred_region
        %s108 = ssub.s32 %s13, 1
        %s109 = sand.u32 %s26, 1
        %s110 = scalar_lea.sflag [#allocation3], %s109
        %s111 = sand.u32 %s26, 1
        %s112 = smul.addr %s111, 8
        %s113 = scalar_lea.vmem [#allocation2], %s112
        // Predicated region
        $region25: #{tpu_custom_call.1} parent=23 // pred_check
          %p114 = pneg %p39
        $region26: #{tpu_custom_call.1} parent=23 // pred_check_branch
          %116 = sbr.rel (%p114) target = $region28
        $region27: #{tpu_custom_call.1} parent=23 // pred_region
          %117 = dma.done %s110, 128
        $region28: #{tpu_custom_call.1} parent=23 // pred_fallthru
          _
        %s118 = sand.u32 %s26, 1
        %s119 = scalar_lea.sflag [#allocation3], %s118
        %s120 = sand.u32 %s26, 1
        %s121 = smul.addr %s120, 8
        %s122 = scalar_lea.vmem [#allocation2], %s121
        %p123 = pneg %p39
        %p124 = pneg %p36
        %p125 = pneg %p65
        %p126 = pneg %p62
        %s127 = sand.u32 %s52, 1
        %s128 = scalar_lea.sflag [#allocation4], %s127
        %s129 = sand.u32 %s52, 1
        %s130 = smul.addr %s129, 8
        %s131 = scalar_lea.vmem [#allocation5], %s130
        %v132 = vld [vmem:[%s113] sm:$0xff]
        %v133 = vand.u32 2147483647, %v132
        %vm134 = vcmp.le.f32.partialorder %v133, 0.7853982
        %vm135 = vcmp.lt.s32.totalorder %v132, 0
        %v136 = vand.u32 %v132, 2139095040
        %v137 = vshrl.u32 %v136, 23
        %v138 = vsub.s32 %v137, 127
        %v139 = vand.u32 2147483647, %v132
        %v140 = vand.u32 %v139, 8388607
        %v141 = vor.u32 %v140, 8388608
        %v142 = vsub.s32 0, %v141
        %v143 = vadd.s32 %v138, 1
        %vm144 = vcmp.gt.s32.totalorder %v143, 0
        %v145 = vsel %vm144, %v143, 0
        %v146 = vshrl.u32 %v145, 5
        %v147 = vand.u32 %v145, 31
        %v148 = vsub.s32 32, %v147
        %v149 = vshrl.u32 683565275, %v148
        %v150 = vshll.u32 683565275, %v147
        %v151 = vshrl.u32 2475754826, %v148
        %v152 = vor.u32 %v150, %v151
        %v153 = vshll.u32 2475754826, %v147
        %v154 = vshrl.u32 2131351028, %v148
        %v155 = vor.u32 %v153, %v154
        %v156 = vshll.u32 2131351028, %v147
        %v157 = vshrl.u32 2102212464, %v148
        %v158 = vor.u32 %v156, %v157
        %v159 = vshll.u32 2102212464, %v147
        %v160 = vshrl.u32 920167782, %v148
        %v161 = vor.u32 %v159, %v160
        %v162 = vshll.u32 920167782, %v147
        %v163 = vshrl.u32 1326507024, %v148
        %v164 = vor.u32 %v162, %v163
        %vm165 = vcmp.lt.s32.totalorder %v146, 1
        %vm166 = vcmp.lt.s32.totalorder %v146, 2
        %vm167 = vcmp.lt.s32.totalorder %v146, 3
        %vm168 = vcmp.lt.s32.totalorder %v146, 4
        %v169 = vsel %vm165, %v149, %v152
        %v170 = vsel %vm168, %v158, 2102212464
        %v171 = vsel %vm167, %v155, %v170
        %v172 = vsel %vm166, %v169, %v171
        %v173 = vsel %vm165, %v152, %v155
        %v174 = vsel %vm168, %v161, 920167782
        %v175 = vsel %vm167, %v158, %v174
        %v176 = vsel %vm166, %v173, %v175
        %v177 = vsel %vm165, %v155, %v158
        %v178 = vsel %vm168, %v164, 1326507024
        %v179 = vsel %vm167, %v161, %v178
        %v180 = vsel %vm166, %v177, %v179
        %v181 = vshll.u32 %v141, 8
        %v182 = vmul.u32.u64.compose %v181, %v180
        %v183 = vextract.low.u32 %v182
        %v184 = vextract.high.u32 %v182
        %v185 = vmul.u32.u64.compose %v181, %v176
        %v186 = vextract.low.u32 %v185
        %v187 = vextract.high.u32 %v185
        %v188 = vmul.u32 %v181, %v172
        %v189 = vadd.s32 %v184, %v186
        %vm190 = vc.u32 %v184, %v186
        %v191 = vadd.s32 %v187, 1
        %v192 = vsel %vm190, %v191, %v187
        %v193 = vadd.s32 %v188, %v192
        %v194 = vadd.s32 %v193, 536870912
        %v195 = vshrl.u32 %v194, 30
        %v196 = vshll.u32 %v195, 30
        %v197 = vsub.s32 %v193, %v196
        %vm198 = vcmp.lt.s32.totalorder %v197, 0
        %v199 = vsub.s32 0, %v197
        %v200 = vsel %vm198, %v199, %v197
        %v201 = vclz %v200
        %v202 = vsub.s32 %v201, 2
        %vm203 = vcmp.gt.s32.totalorder 0, %v202
        %v204 = vsel %vm203, 0, %v202
        %v205 = vsub.s32 32, %v204
        %v206 = vshll.u32 %v197, %v204
        %v207 = vshrl.u32 %v189, %v205
        %v208 = vor.u32 %v206, %v207
        %v209 = vsub.s32 4294967266, %v204
        %v210 = vadd.s32 %v209, 127
        %v211 = vshll.u32 %v210, 23
        %v212 = vor.u32 4788187, %v211
        %v213 = vand.u32 2147483647, %v212
        %v215 = vcvt.s32.f32 %v208
        %v216 = vmul.f32 %v215, %v213
        %v217 = vxor.u32 %v216, 2147483648
        %v218 = vsel %vm135, %v217, %v216
        %v219 = vsub.s32 4, %v195
        %v220 = vsel %vm135, %v219, %v195
        %v221 = vsel %vm134, %v132, %v218
        %v222 = vsel %vm134, 0, %v220
        %v223 = vcosq.f32.pop %v221
        %v224 = vsinq.f32.pop %v221
        %vm225 = vweird.f32 %v132
        %v226 = vadd.s32 %v222, 3
        %v227 = vand.u32 %v226, 3
        %vm228 = vcmp.lt.s32.totalorder %v227, 2
        %vm229 = vcmp.eq.s32.totalorder %v227, 0
        %v230 = vxor.u32 %v224, 2147483648
        %v231 = vsel %vm229, %v223, %v230
        %vm232 = vcmp.eq.s32.totalorder %v227, 2
        %v233 = vxor.u32 %v223, 2147483648
        %v234 = vsel %vm232, %v233, %v224
        %v235 = vsel %vm228, %v231, %v234
        %v236 = vsel %vm225, nan, %v235
        %237 = vst [vmem:[%s131] sm:$0xff] %v236
        %s238 = sand.u32 %s52, 1
        %s239 = scalar_lea.sflag [#allocation4], %s238
        %s240 = sand.u32 %s52, 1
        %s241 = smul.addr %s240, 8
        %s242 = scalar_lea.vmem [#allocation5], %s241
        // Predicated region
        $region29: #{tpu_custom_call.1} parent=23 // pred_check
          %p243 = pneg %p62
        $region30: #{tpu_custom_call.1} parent=23 // pred_check_branch
          %245 = sbr.rel (%p243) target = $region32
        $region31: #{tpu_custom_call.1} parent=23 // pred_region
          %s247 = ssub.s32 128, 128
          %248 = vsyncadd %s239, %s247
          %s249 = smul.addr %s18, 128
          %s250 = scalar_lea.hbm %s1, %s249
          %s252 = sshll.u32 %s242, 4
          %s253 = int_to_ptr.vmem [resolvable:$true] %s252
          %255 = dma.vmem_to_hbm [thread:$0]  %s253, 128, %s250, %s239
        $region32: #{tpu_custom_call.1} parent=23 // pred_fallthru
          _
      $region24: #{tpu_custom_call.1} parent=5 // pred_fallthru
        _
      %p256 = scmp.le.s32.totalorder 2, %s13
      // Predicated region
      $region33: #{tpu_custom_call.1} parent=5 // pred_check
        %p257 = pneg %p256
      $region34: #{tpu_custom_call.1} parent=5 // pred_check_branch
        %259 = sbr.rel (%p257) target = $region36
      $region35: #{tpu_custom_call.1} parent=5 // pred_region
        %s260 = ssub.s32 %s13, 2
        // Predicated region
        $region37: #{tpu_custom_call.1} parent=35 // pred_check
          %p261 = pneg %p68
        $region38: #{tpu_custom_call.1} parent=35 // pred_check_branch
          %263 = sbr.rel (%p261) target = $region40
        $region39: #{tpu_custom_call.1} parent=35 // pred_region
          %s264 = sand.u32 %s53, 1
          %s265 = scalar_lea.sflag [#allocation4], %s264
          %s266 = sand.u32 %s53, 1
          %s267 = smul.addr %s266, 8
          %s268 = scalar_lea.vmem [#allocation5], %s267
          %269 = dma.done %s265, 128
        $region40: #{tpu_custom_call.1} parent=35 // pred_fallthru
          _
      $region36: #{tpu_custom_call.1} parent=5 // pred_fallthru
        _
    $region6: #{tpu_custom_call.1} parent=1 // loop_footer
      %s17 = sadd.s32 1, %s13
    $region7: #{tpu_custom_call.1} parent=1 // loop_footer_branch
      %12 = sbr.rel target = $region3
    $region8: #{tpu_custom_call.1} parent=1 // loop_exit
      _
    %270 = vsyncpa [#allocation3], 1
    %s271 = scalar_lea.sflag [#allocation3], 1
    %272 = vsyncpa %s271, 1
    %273 = vsyncpa [#allocation4], 1
    %s274 = scalar_lea.sflag [#allocation4], 1
    %275 = vsyncpa %s274, 1

</llo_original>
